<compile_context>
chip_gen: v5e
topology: v5e:2x2
jax: 0.10.0
libtpu: 0.0.40
codegen_flags: <defaults>
</compile_context>

<pallas_src>
import functools

import jax
import jax.numpy as jnp
from jax.experimental import pallas as pl
from jax.experimental.pallas import tpu as pltpu

LANE = 128
SUBLANE = 8
MAX_BATCH_TILE = 256


def _round_up(x, m):
    return (x + m - 1) // m * m


def dqn_kernel(x_ref,
               w1_ref, b1_ref,
               w2_ref, b2_ref,
               w3_ref, b3_ref,
               w4_ref, b4_ref,
               w5_ref, b5_ref,
               out_ref):
    """Fully fused 5-layer MLP for one batch tile.

    Matmuls run on the MXU in the (bf16) compute dtype with f32 accumulation;
    bias add / ReLU are f32 on the VPU, then cast back down for the next matmul.
    """
    compute_dtype = x_ref.dtype

    def linear(h, w_ref, b_ref):
        return jnp.dot(h, w_ref[...], preferred_element_type=jnp.float32) + b_ref[...]

    h = x_ref[...]
    h = jnp.maximum(linear(h, w1_ref, b1_ref), 0.0).astype(compute_dtype)
    h = jnp.maximum(linear(h, w2_ref, b2_ref), 0.0).astype(compute_dtype)
    h = jnp.maximum(linear(h, w3_ref, b3_ref), 0.0).astype(compute_dtype)
    h = jnp.maximum(linear(h, w4_ref, b4_ref), 0.0).astype(compute_dtype)
    out_ref[...] = linear(h, w5_ref, b5_ref).astype(out_ref.dtype)


def prepare_dqn_params(params, *, compute_dtype=jnp.bfloat16):
    """One-time prep: cast weights to the MXU compute dtype (biases stay f32),
    zero-pad layer-1's K dim and layer-5's N dim to multiples of 128 lanes."""
    n_layers = len(params)
    prepped = []
    for li, (w, b) in enumerate(params):
        w = w.astype(compute_dtype)
        b = b.astype(jnp.float32)
        if li == 0:
            k, n = w.shape
            k_pad = _round_up(k, LANE)
            if k_pad != k:
                w = jnp.zeros((k_pad, n), compute_dtype).at[:k, :].set(w)
        if li == n_layers - 1:
            k, n = w.shape
            n_pad = _round_up(n, LANE)
            if n_pad != n:
                w = jnp.zeros((k, n_pad), compute_dtype).at[:, :n].set(w)
                b = jnp.zeros((1, n_pad), jnp.float32).at[:, :n].set(b)
        prepped.append((w, b))
    return prepped


@functools.partial(jax.jit, static_argnames=("n_actions", "batch_tile"))
def dqn_forward(x, prepped_params, n_actions, batch_tile=MAX_BATCH_TILE):
    """x: (B, n_observations) f32; prepped_params from prepare_dqn_params."""
    B, n_obs = x.shape
    compute_dtype = prepped_params[0][0].dtype
    k_pad = prepped_params[0][0].shape[0]       # lane-padded input features
    n_pad = prepped_params[-1][0].shape[1]      # lane-padded output features

    # Batch tiling: pad to a sublane multiple, tile at <= batch_tile rows.
    b_sub = _round_up(B, SUBLANE)
    tb = min(batch_tile, b_sub)
    b_pad = _round_up(b_sub, tb)

    x_p = jnp.zeros((b_pad, k_pad), compute_dtype).at[:B, :n_obs].set(
        x.astype(compute_dtype))

    flat = []
    in_specs = [pl.BlockSpec((tb, k_pad), lambda i: (i, 0))]
    for (w, b) in prepped_params:
        flat.extend([w, b])
        # Weights/biases: same block for every batch tile -> stay VMEM-resident.
        in_specs.append(pl.BlockSpec(w.shape, lambda i: (0, 0)))
        in_specs.append(pl.BlockSpec(b.shape, lambda i: (0, 0)))

    out = pl.pallas_call(
        dqn_kernel,
        out_shape=jax.ShapeDtypeStruct((b_pad, n_pad), jnp.float32),
        grid=(b_pad // tb,),
        in_specs=in_specs,
        out_specs=pl.BlockSpec((tb, n_pad), lambda i: (i, 0)),
        compiler_params=pltpu.CompilerParams(
            dimension_semantics=("parallel",),  # shard batch tiles across TCs on v7x
        ),
    )(x_p, *flat)

    return out[:B, :n_actions]


def init_dqn_params(key, n_observations, n_actions):
    """Deterministic init mimicking nn.Linear default U[-1/sqrt(fan_in), 1/sqrt(fan_in)].
    Weights stored as (in_features, out_features) so x @ W + b == PyTorch Linear."""
    sizes = [n_observations, 128, 256, 256, 128, n_actions]
    params = []
    for i in range(len(sizes) - 1):
        fan_in, fan_out = sizes[i], sizes[i + 1]
        key, kw, kb = jax.random.split(key, 3)
        bound = 1.0 / (fan_in ** 0.5)
        w = jax.random.uniform(kw, (fan_in, fan_out), jnp.float32, -bound, bound)
        b = jax.random.uniform(kb, (1, fan_out), jnp.float32, -bound, bound)
        params.append((w, b))
    return params


def dqn_reference_f32(x, params):
    h = x
    for (w, b) in params[:-1]:
        h = jnp.maximum(jnp.dot(h, w) + b, 0.0)
    w, b = params[-1]
    return jnp.dot(h, w) + b


def dqn_reference_bf16(x, params):
    """Same bf16-in / f32-accumulate path as the kernel, in plain JAX."""
    h = x.astype(jnp.bfloat16)
    out = None
    for i, (w, b) in enumerate(params):
        out = jnp.dot(h, w.astype(jnp.bfloat16),
                      preferred_element_type=jnp.float32) + b
        if i < len(params) - 1:
            h = jnp.maximum(out, 0.0).astype(jnp.bfloat16)
    return out


if __name__ == "__main__":
    key = jax.random.PRNGKey(0)
    batch = 8
    n_observations = 16   # small synthetic observation vector
    n_actions = 4         # small discrete action space

    key, kx = jax.random.split(key)
    x = jax.random.normal(kx, (batch, n_observations), jnp.float32)
    params = init_dqn_params(key, n_observations, n_actions)

    prepped = prepare_dqn_params(params)          # one-time weight prep
    out = dqn_forward(x, prepped, n_actions)
    out = jax.block_until_ready(out)

    assert out.shape == (batch, n_actions)
    assert out.dtype == jnp.float32

    ref_bf16 = dqn_reference_bf16(x, params)      # same numerics path
    ref_f32 = dqn_reference_f32(x, params)        # original module semantics
    assert jnp.allclose(out, ref_bf16, atol=1e-2, rtol=1e-2)
    assert jnp.allclose(out, ref_f32, atol=3e-2, rtol=3e-2)

    print("KERNEL_OK")
</pallas_src>

<mosaic_0001>
module attributes {stable_mosaic.version = 11 : i64} {
  func.func @dqn_kernel(%arg0: i32, %arg1: memref<8x128xbf16, #tpu.memory_space<vmem>>, %arg2: memref<128x128xbf16, #tpu.memory_space<vmem>>, %arg3: memref<1x128xf32, #tpu.memory_space<vmem>>, %arg4: memref<128x256xbf16, #tpu.memory_space<vmem>>, %arg5: memref<1x256xf32, #tpu.memory_space<vmem>>, %arg6: memref<256x256xbf16, #tpu.memory_space<vmem>>, %arg7: memref<1x256xf32, #tpu.memory_space<vmem>>, %arg8: memref<256x128xbf16, #tpu.memory_space<vmem>>, %arg9: memref<1x128xf32, #tpu.memory_space<vmem>>, %arg10: memref<128x128xbf16, #tpu.memory_space<vmem>>, %arg11: memref<1x128xf32, #tpu.memory_space<vmem>>, %arg12: memref<8x128xf32, #tpu.memory_space<vmem>>) attributes {dimension_semantics = [#tpu.dimension_semantics<parallel>], iteration_bounds = array<i64: 1>, scalar_prefetch = 0 : i64, scratch_operands = 0 : i64, tpu.core_type = #tpu.core_type<tc>, window_params = [{transform_indices = @transform_0, window_bounds = array<i64: 8, 128>}, {pipeline_mode = #tpu.pipeline_mode<synchronous>, transform_indices = @transform_1, window_bounds = array<i64: 128, 128>}, {pipeline_mode = #tpu.pipeline_mode<synchronous>, transform_indices = @transform_2, window_bounds = array<i64: 1, 128>}, {pipeline_mode = #tpu.pipeline_mode<synchronous>, transform_indices = @transform_3, window_bounds = array<i64: 128, 256>}, {pipeline_mode = #tpu.pipeline_mode<synchronous>, transform_indices = @transform_4, window_bounds = array<i64: 1, 256>}, {pipeline_mode = #tpu.pipeline_mode<synchronous>, transform_indices = @transform_5, window_bounds = array<i64: 256, 256>}, {pipeline_mode = #tpu.pipeline_mode<synchronous>, transform_indices = @transform_6, window_bounds = array<i64: 1, 256>}, {pipeline_mode = #tpu.pipeline_mode<synchronous>, transform_indices = @transform_7, window_bounds = array<i64: 256, 128>}, {pipeline_mode = #tpu.pipeline_mode<synchronous>, transform_indices = @transform_8, window_bounds = array<i64: 1, 128>}, {pipeline_mode = #tpu.pipeline_mode<synchronous>, transform_indices = @transform_9, window_bounds = array<i64: 128, 128>}, {pipeline_mode = #tpu.pipeline_mode<synchronous>, transform_indices = @transform_10, window_bounds = array<i64: 1, 128>}, {transform_indices = @transform_11, window_bounds = array<i64: 8, 128>}]} {
    %c0 = arith.constant 0 : index
    %c0_0 = arith.constant 0 : index
    %0 = vector.load %arg1[%c0, %c0_0] : memref<8x128xbf16, #tpu.memory_space<vmem>>, vector<8x128xbf16>
    %c0_1 = arith.constant 0 : index
    %c0_2 = arith.constant 0 : index
    %1 = vector.load %arg2[%c0_1, %c0_2] : memref<128x128xbf16, #tpu.memory_space<vmem>>, vector<128x128xbf16>
    %cst = arith.constant dense<0.000000e+00> : vector<8x128xf32>
    %2 = tpu.matmul %0, %1, %cst {dimension_numbers = #tpu.dot_dimension_numbers<[1], [0], [0], [1], [0, 0, 1, 1], [], []>} : vector<8x128xbf16>, vector<128x128xbf16>, vector<8x128xf32> -> vector<8x128xf32>
    %c0_3 = arith.constant 0 : index
    %c0_4 = arith.constant 0 : index
    %3 = vector.load %arg3[%c0_3, %c0_4] : memref<1x128xf32, #tpu.memory_space<vmem>>, vector<1x128xf32>
    %4 = vector.broadcast %3 : vector<1x128xf32> to vector<8x128xf32>
    %5 = arith.addf %2, %4 : vector<8x128xf32>
    %cst_5 = arith.constant 0.000000e+00 : f32
    %6 = vector.broadcast %cst_5 : f32 to vector<8x128xf32>
    %7 = arith.maximumf %5, %6 : vector<8x128xf32>
    %8 = arith.truncf %7 : vector<8x128xf32> to vector<8x128xbf16>
    %c0_6 = arith.constant 0 : index
    %c0_7 = arith.constant 0 : index
    %9 = vector.load %arg4[%c0_6, %c0_7] : memref<128x256xbf16, #tpu.memory_space<vmem>>, vector<128x256xbf16>
    %cst_8 = arith.constant dense<0.000000e+00> : vector<8x256xf32>
    %10 = tpu.matmul %8, %9, %cst_8 {dimension_numbers = #tpu.dot_dimension_numbers<[1], [0], [0], [1], [0, 0, 1, 1], [], []>} : vector<8x128xbf16>, vector<128x256xbf16>, vector<8x256xf32> -> vector<8x256xf32>
    %c0_9 = arith.constant 0 : index
    %c0_10 = arith.constant 0 : index
    %11 = vector.load %arg5[%c0_9, %c0_10] : memref<1x256xf32, #tpu.memory_space<vmem>>, vector<1x256xf32>
    %12 = vector.broadcast %11 : vector<1x256xf32> to vector<8x256xf32>
    %13 = arith.addf %10, %12 : vector<8x256xf32>
    %cst_11 = arith.constant 0.000000e+00 : f32
    %14 = vector.broadcast %cst_11 : f32 to vector<8x256xf32>
    %15 = arith.maximumf %13, %14 : vector<8x256xf32>
    %16 = arith.truncf %15 : vector<8x256xf32> to vector<8x256xbf16>
    %c0_12 = arith.constant 0 : index
    %c0_13 = arith.constant 0 : index
    %17 = vector.load %arg6[%c0_12, %c0_13] : memref<256x256xbf16, #tpu.memory_space<vmem>>, vector<256x256xbf16>
    %cst_14 = arith.constant dense<0.000000e+00> : vector<8x256xf32>
    %18 = tpu.matmul %16, %17, %cst_14 {dimension_numbers = #tpu.dot_dimension_numbers<[1], [0], [0], [1], [0, 0, 1, 1], [], []>} : vector<8x256xbf16>, vector<256x256xbf16>, vector<8x256xf32> -> vector<8x256xf32>
    %c0_15 = arith.constant 0 : index
    %c0_16 = arith.constant 0 : index
    %19 = vector.load %arg7[%c0_15, %c0_16] : memref<1x256xf32, #tpu.memory_space<vmem>>, vector<1x256xf32>
    %20 = vector.broadcast %19 : vector<1x256xf32> to vector<8x256xf32>
    %21 = arith.addf %18, %20 : vector<8x256xf32>
    %cst_17 = arith.constant 0.000000e+00 : f32
    %22 = vector.broadcast %cst_17 : f32 to vector<8x256xf32>
    %23 = arith.maximumf %21, %22 : vector<8x256xf32>
    %24 = arith.truncf %23 : vector<8x256xf32> to vector<8x256xbf16>
    %c0_18 = arith.constant 0 : index
    %c0_19 = arith.constant 0 : index
    %25 = vector.load %arg8[%c0_18, %c0_19] : memref<256x128xbf16, #tpu.memory_space<vmem>>, vector<256x128xbf16>
    %cst_20 = arith.constant dense<0.000000e+00> : vector<8x128xf32>
    %26 = tpu.matmul %24, %25, %cst_20 {dimension_numbers = #tpu.dot_dimension_numbers<[1], [0], [0], [1], [0, 0, 1, 1], [], []>} : vector<8x256xbf16>, vector<256x128xbf16>, vector<8x128xf32> -> vector<8x128xf32>
    %c0_21 = arith.constant 0 : index
    %c0_22 = arith.constant 0 : index
    %27 = vector.load %arg9[%c0_21, %c0_22] : memref<1x128xf32, #tpu.memory_space<vmem>>, vector<1x128xf32>
    %28 = vector.broadcast %27 : vector<1x128xf32> to vector<8x128xf32>
    %29 = arith.addf %26, %28 : vector<8x128xf32>
    %cst_23 = arith.constant 0.000000e+00 : f32
    %30 = vector.broadcast %cst_23 : f32 to vector<8x128xf32>
    %31 = arith.maximumf %29, %30 : vector<8x128xf32>
    %32 = arith.truncf %31 : vector<8x128xf32> to vector<8x128xbf16>
    %c0_24 = arith.constant 0 : index
    %c0_25 = arith.constant 0 : index
    %33 = vector.load %arg10[%c0_24, %c0_25] : memref<128x128xbf16, #tpu.memory_space<vmem>>, vector<128x128xbf16>
    %cst_26 = arith.constant dense<0.000000e+00> : vector<8x128xf32>
    %34 = tpu.matmul %32, %33, %cst_26 {dimension_numbers = #tpu.dot_dimension_numbers<[1], [0], [0], [1], [0, 0, 1, 1], [], []>} : vector<8x128xbf16>, vector<128x128xbf16>, vector<8x128xf32> -> vector<8x128xf32>
    %c0_27 = arith.constant 0 : index
    %c0_28 = arith.constant 0 : index
    %35 = vector.load %arg11[%c0_27, %c0_28] : memref<1x128xf32, #tpu.memory_space<vmem>>, vector<1x128xf32>
    %36 = vector.broadcast %35 : vector<1x128xf32> to vector<8x128xf32>
    %37 = arith.addf %34, %36 : vector<8x128xf32>
    %c0_29 = arith.constant 0 : index
    %c0_30 = arith.constant 0 : index
    %38 = vector.load %arg12[%c0_29, %c0_30] : memref<8x128xf32, #tpu.memory_space<vmem>>, vector<8x128xf32>
    tpu.vector_store %arg12[%c0_29, %c0_30], %37 {strides = array<i32>} : memref<8x128xf32, #tpu.memory_space<vmem>>, vector<8x128xf32>,
    return
  }
  func.func @transform_0(%arg0: i32) -> (i32, i32) {
    %c0_i32 = arith.constant 0 : i32
    %c0_i32_0 = arith.constant 0 : i32
    return %arg0, %c0_i32 : i32, i32
  }
  func.func @transform_1(%arg0: i32) -> (i32, i32) {
    %c0_i32 = arith.constant 0 : i32
    %c0_i32_0 = arith.constant 0 : i32
    %c0_i32_1 = arith.constant 0 : i32
    return %c0_i32, %c0_i32_0 : i32, i32
  }
  func.func @transform_2(%arg0: i32) -> (i32, i32) {
    %c0_i32 = arith.constant 0 : i32
    %c0_i32_0 = arith.constant 0 : i32
    %c0_i32_1 = arith.constant 0 : i32
    return %c0_i32, %c0_i32_0 : i32, i32
  }
  func.func @transform_3(%arg0: i32) -> (i32, i32) {
    %c0_i32 = arith.constant 0 : i32
    %c0_i32_0 = arith.constant 0 : i32
    %c0_i32_1 = arith.constant 0 : i32
    return %c0_i32, %c0_i32_0 : i32, i32
  }
  func.func @transform_4(%arg0: i32) -> (i32, i32) {
    %c0_i32 = arith.constant 0 : i32
    %c0_i32_0 = arith.constant 0 : i32
    %c0_i32_1 = arith.constant 0 : i32
    return %c0_i32, %c0_i32_0 : i32, i32
  }
  func.func @transform_5(%arg0: i32) -> (i32, i32) {
    %c0_i32 = arith.constant 0 : i32
    %c0_i32_0 = arith.constant 0 : i32
    %c0_i32_1 = arith.constant 0 : i32
    return %c0_i32, %c0_i32_0 : i32, i32
  }
  func.func @transform_6(%arg0: i32) -> (i32, i32) {
    %c0_i32 = arith.constant 0 : i32
    %c0_i32_0 = arith.constant 0 : i32
    %c0_i32_1 = arith.constant 0 : i32
    return %c0_i32, %c0_i32_0 : i32, i32
  }
  func.func @transform_7(%arg0: i32) -> (i32, i32) {
    %c0_i32 = arith.constant 0 : i32
    %c0_i32_0 = arith.constant 0 : i32
    %c0_i32_1 = arith.constant 0 : i32
    return %c0_i32, %c0_i32_0 : i32, i32
  }
  func.func @transform_8(%arg0: i32) -> (i32, i32) {
    %c0_i32 = arith.constant 0 : i32
    %c0_i32_0 = arith.constant 0 : i32
    %c0_i32_1 = arith.constant 0 : i32
    return %c0_i32, %c0_i32_0 : i32, i32
  }
  func.func @transform_9(%arg0: i32) -> (i32, i32) {
    %c0_i32 = arith.constant 0 : i32
    %c0_i32_0 = arith.constant 0 : i32
    %c0_i32_1 = arith.constant 0 : i32
    return %c0_i32, %c0_i32_0 : i32, i32
  }
  func.func @transform_10(%arg0: i32) -> (i32, i32) {
    %c0_i32 = arith.constant 0 : i32
    %c0_i32_0 = arith.constant 0 : i32
    %c0_i32_1 = arith.constant 0 : i32
    return %c0_i32, %c0_i32_0 : i32, i32
  }
  func.func @transform_11(%arg0: i32) -> (i32, i32) {
    %c0_i32 = arith.constant 0 : i32
    %c0_i32_0 = arith.constant 0 : i32
    return %arg0, %c0_i32 : i32, i32
  }
}

</mosaic_0001>

<llo_original>
// kernel: dqn_forward.1
$region0: #{dqn_forward.1}
  #allocation0 [shape = 'u32[]', space=smem, size = 0x4, offset = 0x4, fixed_abs, tag = 'smem constant byte address 0x4 - core index']
  #allocation1 [shape = 'u32[72,128]{1,0:T(1,128)}', space=vmem, size = 0x9000, scoped, tag = 'internal scratch']
  %s0 = inlined_call_operand.vmem [shape: bf16[8,128], index: 0, kind: input, shape index: {}]
  %s1 = inlined_call_operand.hbm [shape: bf16[128,128], index: 1, kind: input, shape index: {}]
  %s2 = inlined_call_operand.vmem [shape: f32[1,128], index: 2, kind: input, shape index: {}]
  %s3 = inlined_call_operand.hbm [shape: bf16[128,256], index: 3, kind: input, shape index: {}]
  %s4 = inlined_call_operand.vmem [shape: f32[1,256], index: 4, kind: input, shape index: {}]
  %s5 = inlined_call_operand.hbm [shape: bf16[256,256], index: 5, kind: input, shape index: {}]
  %s6 = inlined_call_operand.vmem [shape: f32[1,256], index: 6, kind: input, shape index: {}]
  %s7 = inlined_call_operand.hbm [shape: bf16[256,128], index: 7, kind: input, shape index: {}]
  %s8 = inlined_call_operand.vmem [shape: f32[1,128], index: 8, kind: input, shape index: {}]
  %s9 = inlined_call_operand.hbm [shape: bf16[128,128], index: 9, kind: input, shape index: {}]
  %s10 = inlined_call_operand.vmem [shape: f32[1,128], index: 10, kind: input, shape index: {}]
  %s11 = inlined_call_operand.vmem [shape: f32[8,128], index: 11, kind: output, shape index: {}]
  %s12 = sld [smem:[#allocation0]]
  $region74: #{dqn_forward.1} parent=0
    _
  %s14 = ssub.s32 1, %s12
  %s15 = scalar_select 0, %s14, %s12
  $region1: #{dqn_forward.1} parent=0
    #allocation2 [shape = 'u8[32768]{0}', space=vmem, size = 0x8000, scoped, tag = 'input window, operand 1, single buffered']
    #allocation3 [shape = 's32[1]{0}', space=sflag, size = 0x4, scoped, tag = 'scoped memory for dqn_forward.1']
    #allocation4 [shape = 'u8[65536]{0}', space=vmem, size = 0x10000, scoped, tag = 'input window, operand 3, single buffered']
    #allocation5 [shape = 's32[1]{0}', space=sflag, size = 0x4, scoped, tag = 'scoped memory for dqn_forward.1']
    #allocation6 [shape = 'u8[131072]{0}', space=vmem, size = 0x20000, scoped, tag = 'input window, operand 5, single buffered']
    #allocation7 [shape = 'u8[65536]{0}', space=vmem, size = 0x10000, scoped, tag = 'input window, operand 7, single buffered']
    #allocation8 [shape = 's32[1]{0}', space=sflag, size = 0x4, scoped, tag = 'scoped memory for dqn_forward.1']
    #allocation9 [shape = 'u8[32768]{0}', space=vmem, size = 0x8000, scoped, tag = 'input window, operand 9, single buffered']
    %16 = vsyncpa [#allocation3], 0
    %17 = vsyncpa [#allocation5], 0
    %18 = vsyncpa [#allocation8], 0
    // Predicated region
    $region2: #{dqn_forward.1} parent=1 // pred_check
      _
    $region3: #{dqn_forward.1} parent=1 // pred_check_branch
      %20 = sbr.rel (0) target = $region5
    $region4: #{dqn_forward.1} parent=1 // pred_region
      _
    $region5: #{dqn_forward.1} parent=1 // pred_fallthru
      _
    // Predicated region
    $region6: #{dqn_forward.1} parent=1 // pred_check
      _
    $region7: #{dqn_forward.1} parent=1 // pred_check_branch
      %22 = sbr.rel (0) target = $region9
    $region8: #{dqn_forward.1} parent=1 // pred_region
      %24 = vsyncadd [#allocation3], 0
      %s25 = sshll.u32 %s1, 4
      %s26 = int_to_ptr.hbm [resolvable:$true] %s25
      %s27 = sshll.u32 [#allocation2], 4
      %s28 = int_to_ptr.vmem [resolvable:$true] %s27
      %33 = dma.hbm_to_vmem [thread:$0]  %s26, 1024, %s28, [#allocation3], 64, 64, 4
    $region9: #{dqn_forward.1} parent=1 // pred_fallthru
      _
    // Predicated region
    $region10: #{dqn_forward.1} parent=1 // pred_check
      _
    $region11: #{dqn_forward.1} parent=1 // pred_check_branch
      %35 = sbr.rel (0) target = $region13
    $region12: #{dqn_forward.1} parent=1 // pred_region
      _
    $region13: #{dqn_forward.1} parent=1 // pred_fallthru
      _
    // Predicated region
    $region14: #{dqn_forward.1} parent=1 // pred_check
      _
    $region15: #{dqn_forward.1} parent=1 // pred_check_branch
      %37 = sbr.rel (0) target = $region17
    $region16: #{dqn_forward.1} parent=1 // pred_region
      %39 = vsyncadd [#allocation5], 0
      %s40 = sshll.u32 %s3, 4
      %s41 = int_to_ptr.hbm [resolvable:$true] %s40
      %s42 = sshll.u32 [#allocation4], 4
      %s43 = int_to_ptr.vmem [resolvable:$true] %s42
      %48 = dma.hbm_to_vmem [thread:$0]  %s41, 2048, %s43, [#allocation5], 128, 128, 8
    $region17: #{dqn_forward.1} parent=1 // pred_fallthru
      _
    // Predicated region
    $region18: #{dqn_forward.1} parent=1 // pred_check
      _
    $region19: #{dqn_forward.1} parent=1 // pred_check_branch
      %50 = sbr.rel (0) target = $region21
    $region20: #{dqn_forward.1} parent=1 // pred_region
      _
    $region21: #{dqn_forward.1} parent=1 // pred_fallthru
      _
    // Predicated region
    $region22: #{dqn_forward.1} parent=1 // pred_check
      _
    $region23: #{dqn_forward.1} parent=1 // pred_check_branch
      %52 = sbr.rel (0) target = $region25
    $region24: #{dqn_forward.1} parent=1 // pred_region
      %54 = vsyncadd [#allocation5], 0
      %s55 = sshll.u32 %s5, 4
      %s56 = int_to_ptr.hbm [resolvable:$true] %s55
      %s57 = sshll.u32 [#allocation6], 4
      %s58 = int_to_ptr.vmem [resolvable:$true] %s57
      %63 = dma.hbm_to_vmem [thread:$0]  %s56, 4096, %s58, [#allocation5], 128, 128, 8
    $region25: #{dqn_forward.1} parent=1 // pred_fallthru
      _
    // Predicated region
    $region26: #{dqn_forward.1} parent=1 // pred_check
      _
    $region27: #{dqn_forward.1} parent=1 // pred_check_branch
      %65 = sbr.rel (0) target = $region29
    $region28: #{dqn_forward.1} parent=1 // pred_region
      _
    $region29: #{dqn_forward.1} parent=1 // pred_fallthru
      _
    // Predicated region
    $region30: #{dqn_forward.1} parent=1 // pred_check
      _
    $region31: #{dqn_forward.1} parent=1 // pred_check_branch
      %67 = sbr.rel (0) target = $region33
    $region32: #{dqn_forward.1} parent=1 // pred_region
      %69 = vsyncadd [#allocation8], 0
      %s70 = sshll.u32 %s7, 4
      %s71 = int_to_ptr.hbm [resolvable:$true] %s70
      %s72 = sshll.u32 [#allocation7], 4
      %s73 = int_to_ptr.vmem [resolvable:$true] %s72
      %78 = dma.hbm_to_vmem [thread:$0]  %s71, 2048, %s73, [#allocation8], 64, 64, 4
    $region33: #{dqn_forward.1} parent=1 // pred_fallthru
      _
    // Predicated region
    $region34: #{dqn_forward.1} parent=1 // pred_check
      _
    $region35: #{dqn_forward.1} parent=1 // pred_check_branch
      %80 = sbr.rel (0) target = $region37
    $region36: #{dqn_forward.1} parent=1 // pred_region
      _
    $region37: #{dqn_forward.1} parent=1 // pred_fallthru
      _
    // Predicated region
    $region38: #{dqn_forward.1} parent=1 // pred_check
      _
    $region39: #{dqn_forward.1} parent=1 // pred_check_branch
      %82 = sbr.rel (0) target = $region41
    $region40: #{dqn_forward.1} parent=1 // pred_region
      %84 = vsyncadd [#allocation8], 0
      %s85 = sshll.u32 %s9, 4
      %s86 = int_to_ptr.hbm [resolvable:$true] %s85
      %s87 = sshll.u32 [#allocation9], 4
      %s88 = int_to_ptr.vmem [resolvable:$true] %s87
      %93 = dma.hbm_to_vmem [thread:$0]  %s86, 1024, %s88, [#allocation8], 64, 64, 4
    $region41: #{dqn_forward.1} parent=1 // pred_fallthru
      _
    // Predicated region
    $region42: #{dqn_forward.1} parent=1 // pred_check
      _
    $region43: #{dqn_forward.1} parent=1 // pred_check_branch
      %95 = sbr.rel (0) target = $region45
    $region44: #{dqn_forward.1} parent=1 // pred_region
      _
    $region45: #{dqn_forward.1} parent=1 // pred_fallthru
      _
    // Predicated region
    $region46: #{dqn_forward.1} parent=1 // pred_check
      _
    $region47: #{dqn_forward.1} parent=1 // pred_check_branch
      %97 = sbr.rel (0) target = $region49
    $region48: #{dqn_forward.1} parent=1 // pred_region
      %99 = dma.done [#allocation3], 1024
    $region49: #{dqn_forward.1} parent=1 // pred_fallthru
      _
    // Predicated region
    $region50: #{dqn_forward.1} parent=1 // pred_check
      _
    $region51: #{dqn_forward.1} parent=1 // pred_check_branch
      %101 = sbr.rel (0) target = $region53
    $region52: #{dqn_forward.1} parent=1 // pred_region
      %103 = dma.done [#allocation5], 2048
    $region53: #{dqn_forward.1} parent=1 // pred_fallthru
      _
    // Predicated region
    $region54: #{dqn_forward.1} parent=1 // pred_check
      _
    $region55: #{dqn_forward.1} parent=1 // pred_check_branch
      %105 = sbr.rel (0) target = $region57
    $region56: #{dqn_forward.1} parent=1 // pred_region
      %107 = dma.done [#allocation5], 4096
    $region57: #{dqn_forward.1} parent=1 // pred_fallthru
      _
    // Predicated region
    $region58: #{dqn_forward.1} parent=1 // pred_check
      _
    $region59: #{dqn_forward.1} parent=1 // pred_check_branch
      %109 = sbr.rel (0) target = $region61
    $region60: #{dqn_forward.1} parent=1 // pred_region
      %111 = dma.done [#allocation8], 2048
    $region61: #{dqn_forward.1} parent=1 // pred_fallthru
      _
    // Predicated region
    $region62: #{dqn_forward.1} parent=1 // pred_check
      _
    $region63: #{dqn_forward.1} parent=1 // pred_check_branch
      %113 = sbr.rel (0) target = $region65
    $region64: #{dqn_forward.1} parent=1 // pred_region
      %115 = dma.done [#allocation8], 1024
    $region65: #{dqn_forward.1} parent=1 // pred_fallthru
      _
    %v116 = vld [vmem:[%s0] sm:$0xf]
    %v117 = vld [vmem:[#allocation2] sm:$0xf]
    %v118 = vld [vmem:[#allocation2 + $0x4] sm:$0xf]
    %v119 = vld [vmem:[#allocation2 + $0x8] sm:$0xf]
    %v120 = vld [vmem:[#allocation2 + $0xc] sm:$0xf]
    %v121 = vld [vmem:[#allocation2 + $0x10] sm:$0xf]
    %v122 = vld [vmem:[#allocation2 + $0x14] sm:$0xf]
    %v123 = vld [vmem:[#allocation2 + $0x18] sm:$0xf]
    %v124 = vld [vmem:[#allocation2 + $0x1c] sm:$0xf]
    %v125 = vld [vmem:[#allocation2 + $0x20] sm:$0xf]
    %v126 = vld [vmem:[#allocation2 + $0x24] sm:$0xf]
    %v127 = vld [vmem:[#allocation2 + $0x28] sm:$0xf]
    %v128 = vld [vmem:[#allocation2 + $0x2c] sm:$0xf]
    %v129 = vld [vmem:[#allocation2 + $0x30] sm:$0xf]
    %v130 = vld [vmem:[#allocation2 + $0x34] sm:$0xf]
    %v131 = vld [vmem:[#allocation2 + $0x38] sm:$0xf]
    %v132 = vld [vmem:[#allocation2 + $0x3c] sm:$0xf]
    %v133 = vld [vmem:[%s2] sm:$0x1]
    %v135 = vperm.slane %v133, 0
    %v153 = vunpack.c.l.b16 %v117
    %v154 = vunpack.c.l.b16 %v118
    %v155 = vunpack.c.l.b16 %v119
    %v156 = vunpack.c.l.b16 %v120
    %v157 = vunpack.c.l.b16 %v121
    %v158 = vunpack.c.l.b16 %v122
    %v159 = vunpack.c.l.b16 %v123
    %v160 = vunpack.c.l.b16 %v124
    %v161 = vunpack.c.l.b16 %v125
    %v162 = vunpack.c.l.b16 %v126
    %v163 = vunpack.c.l.b16 %v127
    %v164 = vunpack.c.l.b16 %v128
    %v165 = vunpack.c.l.b16 %v129
    %v166 = vunpack.c.l.b16 %v130
    %v167 = vunpack.c.l.b16 %v131
    %v168 = vunpack.c.l.b16 %v132
    %v169 = vpack.c.b16 %v154, %v153
    %v170 = vpack.c.b16 %v156, %v155
    %v171 = vpack.c.b16 %v158, %v157
    %v172 = vpack.c.b16 %v160, %v159
    %v173 = vpack.c.b16 %v162, %v161
    %v174 = vpack.c.b16 %v164, %v163
    %v175 = vpack.c.b16 %v166, %v165
    %v176 = vpack.c.b16 %v168, %v167
    %185 = vmatpush.bf16.msra.mxu0 %v176
    %186 = vmatpush.bf16.msra.mxu0 %v175
    %187 = vmatpush.bf16.msra.mxu0 %v174
    %188 = vmatpush.bf16.msra.mxu0 %v173
    %189 = vmatpush.bf16.msra.mxu0 %v172
    %190 = vmatpush.bf16.msra.mxu0 %v171
    %191 = vmatpush.bf16.msra.mxu0 %v170
    %192 = vmatpush.bf16.msra.mxu0 %v169
    %193 = vmatmul.bf16.gmra.mxu0 %v116
    %v194 = vpop.f32.mrf.mxu0
    %v195 = vadd.f32 %v135, %v194
    %v196 = vpop.f32.mrf.mxu0
    %197 = vdwg.mxu0
    %v198 = vmax.f32 %v195, 0.0
    %v199 = vpack.c.bf16 %v198, %v198
    %v200 = vld [vmem:[#allocation4] sm:$0xff]
    %v201 = vld [vmem:[#allocation4 + $0x8] sm:$0xff]
    %v202 = vld [vmem:[#allocation4 + $0x10] sm:$0xff]
    %v203 = vld [vmem:[#allocation4 + $0x18] sm:$0xff]
    %v204 = vld [vmem:[#allocation4 + $0x20] sm:$0xff]
    %v205 = vld [vmem:[#allocation4 + $0x28] sm:$0xff]
    %v206 = vld [vmem:[#allocation4 + $0x30] sm:$0xff]
    %v207 = vld [vmem:[#allocation4 + $0x38] sm:$0xff]
    %v208 = vld [vmem:[#allocation4 + $0x40] sm:$0xff]
    %v209 = vld [vmem:[#allocation4 + $0x48] sm:$0xff]
    %v210 = vld [vmem:[#allocation4 + $0x50] sm:$0xff]
    %v211 = vld [vmem:[#allocation4 + $0x58] sm:$0xff]
    %v212 = vld [vmem:[#allocation4 + $0x60] sm:$0xff]
    %v213 = vld [vmem:[#allocation4 + $0x68] sm:$0xff]
    %v214 = vld [vmem:[#allocation4 + $0x70] sm:$0xff]
    %v215 = vld [vmem:[#allocation4 + $0x78] sm:$0xff]
    %v216 = vld [vmem:[%s4] sm:$0x3]
    %v218 = vperm.slane %v216, 0
    %v219 = vperm.slane %v216, 1
    %v238 = vunpack.c.l.b16 %v200
    %v239 = vunpack.c.h.b16 %v200
    %v240 = vunpack.c.l.b16 %v201
    %v241 = vunpack.c.h.b16 %v201
    %v242 = vunpack.c.l.b16 %v202
    %v243 = vunpack.c.h.b16 %v202
    %v244 = vunpack.c.l.b16 %v203
    %v245 = vunpack.c.h.b16 %v203
    %v246 = vunpack.c.l.b16 %v204
    %v247 = vunpack.c.h.b16 %v204
    %v248 = vunpack.c.l.b16 %v205
    %v249 = vunpack.c.h.b16 %v205
    %v250 = vunpack.c.l.b16 %v206
    %v251 = vunpack.c.h.b16 %v206
    %v252 = vunpack.c.l.b16 %v207
    %v253 = vunpack.c.h.b16 %v207
    %v254 = vunpack.c.l.b16 %v208
    %v255 = vunpack.c.h.b16 %v208
    %v256 = vunpack.c.l.b16 %v209
    %v257 = vunpack.c.h.b16 %v209
    %v258 = vunpack.c.l.b16 %v210
    %v259 = vunpack.c.h.b16 %v210
    %v260 = vunpack.c.l.b16 %v211
    %v261 = vunpack.c.h.b16 %v211
    %v262 = vunpack.c.l.b16 %v212
    %v263 = vunpack.c.h.b16 %v212
    %v264 = vunpack.c.l.b16 %v213
    %v265 = vunpack.c.h.b16 %v213
    %v266 = vunpack.c.l.b16 %v214
    %v267 = vunpack.c.h.b16 %v214
    %v268 = vunpack.c.l.b16 %v215
    %v269 = vunpack.c.h.b16 %v215
    %v270 = vpack.c.b16 %v240, %v238
    %v271 = vpack.c.b16 %v241, %v239
    %v272 = vpack.c.b16 %v244, %v242
    %v273 = vpack.c.b16 %v245, %v243
    %v274 = vpack.c.b16 %v248, %v246
    %v275 = vpack.c.b16 %v249, %v247
    %v276 = vpack.c.b16 %v252, %v250
    %v277 = vpack.c.b16 %v253, %v251
    %v278 = vpack.c.b16 %v256, %v254
    %v279 = vpack.c.b16 %v257, %v255
    %v280 = vpack.c.b16 %v260, %v258
    %v281 = vpack.c.b16 %v261, %v259
    %v282 = vpack.c.b16 %v264, %v262
    %v283 = vpack.c.b16 %v265, %v263
    %v284 = vpack.c.b16 %v268, %v266
    %v285 = vpack.c.b16 %v269, %v267
    %302 = vmatpush.bf16.msra.mxu0 %v284
    %303 = vmatpush.bf16.msra.mxu0 %v282
    %304 = vmatpush.bf16.msra.mxu0 %v280
    %305 = vmatpush.bf16.msra.mxu0 %v278
    %306 = vmatpush.bf16.msra.mxu0 %v276
    %307 = vmatpush.bf16.msra.mxu0 %v274
    %308 = vmatpush.bf16.msra.mxu0 %v272
    %309 = vmatpush.bf16.msra.mxu0 %v270
    %310 = vmatmul.bf16.gmra.mxu0 %v199
    %v311 = vpop.f32.mrf.mxu0
    %v312 = vadd.f32 %v218, %v311
    %v313 = vpop.f32.mrf.mxu0
    %314 = vdwg.mxu0
    %315 = vmatpush.bf16.msra.mxu0 %v285
    %316 = vmatpush.bf16.msra.mxu0 %v283
    %317 = vmatpush.bf16.msra.mxu0 %v281
    %318 = vmatpush.bf16.msra.mxu0 %v279
    %319 = vmatpush.bf16.msra.mxu0 %v277
    %320 = vmatpush.bf16.msra.mxu0 %v275
    %321 = vmatpush.bf16.msra.mxu0 %v273
    %322 = vmatpush.bf16.msra.mxu0 %v271
    %323 = vmatmul.bf16.gmra.mxu0 %v199
    %v324 = vpop.f32.mrf.mxu0
    %v325 = vadd.f32 %v219, %v324
    %v326 = vpop.f32.mrf.mxu0
    %327 = vdwg.mxu0
    %v328 = vmax.f32 %v312, 0.0
    %v329 = vmax.f32 %v325, 0.0
    %v330 = vpack.c.bf16 %v328, %v328
    %v331 = vpack.c.bf16 %v329, %v329
    %v332 = vld [vmem:[#allocation6] sm:$0xff]
    %v333 = vld [vmem:[#allocation6 + $0x8] sm:$0xff]
    %v334 = vld [vmem:[#allocation6 + $0x10] sm:$0xff]
    %v335 = vld [vmem:[#allocation6 + $0x18] sm:$0xff]
    %v336 = vld [vmem:[#allocation6 + $0x20] sm:$0xff]
    %v337 = vld [vmem:[#allocation6 + $0x28] sm:$0xff]
    %v338 = vld [vmem:[#allocation6 + $0x30] sm:$0xff]
    %v339 = vld [vmem:[#allocation6 + $0x38] sm:$0xff]
    %v340 = vld [vmem:[#allocation6 + $0x40] sm:$0xff]
    %v341 = vld [vmem:[#allocation6 + $0x48] sm:$0xff]
    %v342 = vld [vmem:[#allocation6 + $0x50] sm:$0xff]
    %v343 = vld [vmem:[#allocation6 + $0x58] sm:$0xff]
    %v344 = vld [vmem:[#allocation6 + $0x60] sm:$0xff]
    %v345 = vld [vmem:[#allocation6 + $0x68] sm:$0xff]
    %v346 = vld [vmem:[#allocation6 + $0x70] sm:$0xff]
    %v347 = vld [vmem:[#allocation6 + $0x78] sm:$0xff]
    %v348 = vld [vmem:[#allocation6 + $0x80] sm:$0xff]
    %v349 = vld [vmem:[#allocation6 + $0x88] sm:$0xff]
    %v350 = vld [vmem:[#allocation6 + $0x90] sm:$0xff]
    %v351 = vld [vmem:[#allocation6 + $0x98] sm:$0xff]
    %v352 = vld [vmem:[#allocation6 + $0xa0] sm:$0xff]
    %v353 = vld [vmem:[#allocation6 + $0xa8] sm:$0xff]
    %v354 = vld [vmem:[#allocation6 + $0xb0] sm:$0xff]
    %v355 = vld [vmem:[#allocation6 + $0xb8] sm:$0xff]
    %v356 = vld [vmem:[#allocation6 + $0xc0] sm:$0xff]
    %v357 = vld [vmem:[#allocation6 + $0xc8] sm:$0xff]
    %v358 = vld [vmem:[#allocation6 + $0xd0] sm:$0xff]
    %v359 = vld [vmem:[#allocation6 + $0xd8] sm:$0xff]
    %v360 = vld [vmem:[#allocation6 + $0xe0] sm:$0xff]
    %v361 = vld [vmem:[#allocation6 + $0xe8] sm:$0xff]
    %v362 = vld [vmem:[#allocation6 + $0xf0] sm:$0xff]
    %v363 = vld [vmem:[#allocation6 + $0xf8] sm:$0xff]
    %v364 = vld [vmem:[%s6] sm:$0x3]
    %v366 = vperm.slane %v364, 0
    %v367 = vperm.slane %v364, 1
    %v402 = vunpack.c.l.b16 %v332
    %v403 = vunpack.c.h.b16 %v332
    %v404 = vunpack.c.l.b16 %v333
    %v405 = vunpack.c.h.b16 %v333
    %v406 = vunpack.c.l.b16 %v334
    %v407 = vunpack.c.h.b16 %v334
    %v408 = vunpack.c.l.b16 %v335
    %v409 = vunpack.c.h.b16 %v335
    %v410 = vunpack.c.l.b16 %v336
    %v411 = vunpack.c.h.b16 %v336
    %v412 = vunpack.c.l.b16 %v337
    %v413 = vunpack.c.h.b16 %v337
    %v414 = vunpack.c.l.b16 %v338
    %v415 = vunpack.c.h.b16 %v338
    %v416 = vunpack.c.l.b16 %v339
    %v417 = vunpack.c.h.b16 %v339
    %v418 = vunpack.c.l.b16 %v340
    %v419 = vunpack.c.h.b16 %v340
    %v420 = vunpack.c.l.b16 %v341
    %v421 = vunpack.c.h.b16 %v341
    %v422 = vunpack.c.l.b16 %v342
    %v423 = vunpack.c.h.b16 %v342
    %v424 = vunpack.c.l.b16 %v343
    %v425 = vunpack.c.h.b16 %v343
    %v426 = vunpack.c.l.b16 %v344
    %v427 = vunpack.c.h.b16 %v344
    %v428 = vunpack.c.l.b16 %v345
    %v429 = vunpack.c.h.b16 %v345
    %v430 = vunpack.c.l.b16 %v346
    %v431 = vunpack.c.h.b16 %v346
    %v432 = vunpack.c.l.b16 %v347
    %v433 = vunpack.c.h.b16 %v347
    %v434 = vunpack.c.l.b16 %v348
    %v435 = vunpack.c.h.b16 %v348
    %v436 = vunpack.c.l.b16 %v349
    %v437 = vunpack.c.h.b16 %v349
    %v438 = vunpack.c.l.b16 %v350
    %v439 = vunpack.c.h.b16 %v350
    %v440 = vunpack.c.l.b16 %v351
    %v441 = vunpack.c.h.b16 %v351
    %v442 = vunpack.c.l.b16 %v352
    %v443 = vunpack.c.h.b16 %v352
    %v444 = vunpack.c.l.b16 %v353
    %v445 = vunpack.c.h.b16 %v353
    %v446 = vunpack.c.l.b16 %v354
    %v447 = vunpack.c.h.b16 %v354
    %v448 = vunpack.c.l.b16 %v355
    %v449 = vunpack.c.h.b16 %v355
    %v450 = vunpack.c.l.b16 %v356
    %v451 = vunpack.c.h.b16 %v356
    %v452 = vunpack.c.l.b16 %v357
    %v453 = vunpack.c.h.b16 %v357
    %v454 = vunpack.c.l.b16 %v358
    %v455 = vunpack.c.h.b16 %v358
    %v456 = vunpack.c.l.b16 %v359
    %v457 = vunpack.c.h.b16 %v359
    %v458 = vunpack.c.l.b16 %v360
    %v459 = vunpack.c.h.b16 %v360
    %v460 = vunpack.c.l.b16 %v361
    %v461 = vunpack.c.h.b16 %v361
    %v462 = vunpack.c.l.b16 %v362
    %v463 = vunpack.c.h.b16 %v362
    %v464 = vunpack.c.l.b16 %v363
    %v465 = vunpack.c.h.b16 %v363
    %v466 = vpack.c.b16 %v404, %v402
    %v467 = vpack.c.b16 %v405, %v403
    %v468 = vpack.c.b16 %v408, %v406
    %v469 = vpack.c.b16 %v409, %v407
    %v470 = vpack.c.b16 %v412, %v410
    %v471 = vpack.c.b16 %v413, %v411
    %v472 = vpack.c.b16 %v416, %v414
    %v473 = vpack.c.b16 %v417, %v415
    %v474 = vpack.c.b16 %v420, %v418
    %v475 = vpack.c.b16 %v421, %v419
    %v476 = vpack.c.b16 %v424, %v422
    %v477 = vpack.c.b16 %v425, %v423
    %v478 = vpack.c.b16 %v428, %v426
    %v479 = vpack.c.b16 %v429, %v427
    %v480 = vpack.c.b16 %v432, %v430
    %v481 = vpack.c.b16 %v433, %v431
    %v482 = vpack.c.b16 %v436, %v434
    %v483 = vpack.c.b16 %v437, %v435
    %v484 = vpack.c.b16 %v440, %v438
    %v485 = vpack.c.b16 %v441, %v439
    %v486 = vpack.c.b16 %v444, %v442
    %v487 = vpack.c.b16 %v445, %v443
    %v488 = vpack.c.b16 %v448, %v446
    %v489 = vpack.c.b16 %v449, %v447
    %v490 = vpack.c.b16 %v452, %v450
    %v491 = vpack.c.b16 %v453, %v451
    %v492 = vpack.c.b16 %v456, %v454
    %v493 = vpack.c.b16 %v457, %v455
    %v494 = vpack.c.b16 %v460, %v458
    %v495 = vpack.c.b16 %v461, %v459
    %v496 = vpack.c.b16 %v464, %v462
    %v497 = vpack.c.b16 %v465, %v463
    %530 = vmatpush.bf16.msra.mxu0 %v480
    %531 = vmatpush.bf16.msra.mxu0 %v478
    %532 = vmatpush.bf16.msra.mxu0 %v476
    %533 = vmatpush.bf16.msra.mxu0 %v474
    %534 = vmatpush.bf16.msra.mxu0 %v472
    %535 = vmatpush.bf16.msra.mxu0 %v470
    %536 = vmatpush.bf16.msra.mxu0 %v468
    %537 = vmatpush.bf16.msra.mxu0 %v466
    %538 = vmatmul.bf16.gmra.mxu0 %v330
    %v539 = vpop.f32.mrf.mxu0
    %v540 = vadd.f32 %v366, %v539
    %v541 = vpop.f32.mrf.mxu0
    %542 = vdwg.mxu0
    %543 = vmatpush.bf16.msra.mxu0 %v496
    %544 = vmatpush.bf16.msra.mxu0 %v494
    %545 = vmatpush.bf16.msra.mxu0 %v492
    %546 = vmatpush.bf16.msra.mxu0 %v490
    %547 = vmatpush.bf16.msra.mxu0 %v488
    %548 = vmatpush.bf16.msra.mxu0 %v486
    %549 = vmatpush.bf16.msra.mxu0 %v484
    %550 = vmatpush.bf16.msra.mxu0 %v482
    %551 = vmatmul.bf16.gmra.mxu0 %v331
    %v552 = vpop.f32.mrf.mxu0
    %v553 = vadd.f32 %v540, %v552
    %v554 = vpop.f32.mrf.mxu0
    %555 = vdwg.mxu0
    %556 = vmatpush.bf16.msra.mxu0 %v481
    %557 = vmatpush.bf16.msra.mxu0 %v479
    %558 = vmatpush.bf16.msra.mxu0 %v477
    %559 = vmatpush.bf16.msra.mxu0 %v475
    %560 = vmatpush.bf16.msra.mxu0 %v473
    %561 = vmatpush.bf16.msra.mxu0 %v471
    %562 = vmatpush.bf16.msra.mxu0 %v469
    %563 = vmatpush.bf16.msra.mxu0 %v467
    %564 = vmatmul.bf16.gmra.mxu0 %v330
    %v565 = vpop.f32.mrf.mxu0
    %v566 = vadd.f32 %v367, %v565
    %v567 = vpop.f32.mrf.mxu0
    %568 = vdwg.mxu0
    %569 = vmatpush.bf16.msra.mxu0 %v497
    %570 = vmatpush.bf16.msra.mxu0 %v495
    %571 = vmatpush.bf16.msra.mxu0 %v493
    %572 = vmatpush.bf16.msra.mxu0 %v491
    %573 = vmatpush.bf16.msra.mxu0 %v489
    %574 = vmatpush.bf16.msra.mxu0 %v487
    %575 = vmatpush.bf16.msra.mxu0 %v485
    %576 = vmatpush.bf16.msra.mxu0 %v483
    %577 = vmatmul.bf16.gmra.mxu0 %v331
    %v578 = vpop.f32.mrf.mxu0
    %v579 = vadd.f32 %v566, %v578
    %v580 = vpop.f32.mrf.mxu0
    %581 = vdwg.mxu0
    %v582 = vmax.f32 %v553, 0.0
    %v583 = vmax.f32 %v579, 0.0
    %v584 = vpack.c.bf16 %v582, %v582
    %v585 = vpack.c.bf16 %v583, %v583
    %v586 = vld [vmem:[#allocation7] sm:$0xf]
    %v587 = vld [vmem:[#allocation7 + $0x4] sm:$0xf]
    %v588 = vld [vmem:[#allocation7 + $0x8] sm:$0xf]
    %v589 = vld [vmem:[#allocation7 + $0xc] sm:$0xf]
    %v590 = vld [vmem:[#allocation7 + $0x10] sm:$0xf]
    %v591 = vld [vmem:[#allocation7 + $0x14] sm:$0xf]
    %v592 = vld [vmem:[#allocation7 + $0x18] sm:$0xf]
    %v593 = vld [vmem:[#allocation7 + $0x1c] sm:$0xf]
    %v594 = vld [vmem:[#allocation7 + $0x20] sm:$0xf]
    %v595 = vld [vmem:[#allocation7 + $0x24] sm:$0xf]
    %v596 = vld [vmem:[#allocation7 + $0x28] sm:$0xf]
    %v597 = vld [vmem:[#allocation7 + $0x2c] sm:$0xf]
    %v598 = vld [vmem:[#allocation7 + $0x30] sm:$0xf]
    %v599 = vld [vmem:[#allocation7 + $0x34] sm:$0xf]
    %v600 = vld [vmem:[#allocation7 + $0x38] sm:$0xf]
    %v601 = vld [vmem:[#allocation7 + $0x3c] sm:$0xf]
    %v602 = vld [vmem:[#allocation7 + $0x40] sm:$0xf]
    %v603 = vld [vmem:[#allocation7 + $0x44] sm:$0xf]
    %v604 = vld [vmem:[#allocation7 + $0x48] sm:$0xf]
    %v605 = vld [vmem:[#allocation7 + $0x4c] sm:$0xf]
    %v606 = vld [vmem:[#allocation7 + $0x50] sm:$0xf]
    %v607 = vld [vmem:[#allocation7 + $0x54] sm:$0xf]
    %v608 = vld [vmem:[#allocation7 + $0x58] sm:$0xf]
    %v609 = vld [vmem:[#allocation7 + $0x5c] sm:$0xf]
    %v610 = vld [vmem:[#allocation7 + $0x60] sm:$0xf]
    %v611 = vld [vmem:[#allocation7 + $0x64] sm:$0xf]
    %v612 = vld [vmem:[#allocation7 + $0x68] sm:$0xf]
    %v613 = vld [vmem:[#allocation7 + $0x6c] sm:$0xf]
    %v614 = vld [vmem:[#allocation7 + $0x70] sm:$0xf]
    %v615 = vld [vmem:[#allocation7 + $0x74] sm:$0xf]
    %v616 = vld [vmem:[#allocation7 + $0x78] sm:$0xf]
    %v617 = vld [vmem:[#allocation7 + $0x7c] sm:$0xf]
    %v618 = vld [vmem:[%s8] sm:$0x1]
    %v620 = vperm.slane %v618, 0
    %v654 = vunpack.c.l.b16 %v586
    %v655 = vunpack.c.l.b16 %v587
    %v656 = vunpack.c.l.b16 %v588
    %v657 = vunpack.c.l.b16 %v589
    %v658 = vunpack.c.l.b16 %v590
    %v659 = vunpack.c.l.b16 %v591
    %v660 = vunpack.c.l.b16 %v592
    %v661 = vunpack.c.l.b16 %v593
    %v662 = vunpack.c.l.b16 %v594
    %v663 = vunpack.c.l.b16 %v595
    %v664 = vunpack.c.l.b16 %v596
    %v665 = vunpack.c.l.b16 %v597
    %v666 = vunpack.c.l.b16 %v598
    %v667 = vunpack.c.l.b16 %v599
    %v668 = vunpack.c.l.b16 %v600
    %v669 = vunpack.c.l.b16 %v601
    %v670 = vunpack.c.l.b16 %v602
    %v671 = vunpack.c.l.b16 %v603
    %v672 = vunpack.c.l.b16 %v604
    %v673 = vunpack.c.l.b16 %v605
    %v674 = vunpack.c.l.b16 %v606
    %v675 = vunpack.c.l.b16 %v607
    %v676 = vunpack.c.l.b16 %v608
    %v677 = vunpack.c.l.b16 %v609
    %v678 = vunpack.c.l.b16 %v610
    %v679 = vunpack.c.l.b16 %v611
    %v680 = vunpack.c.l.b16 %v612
    %v681 = vunpack.c.l.b16 %v613
    %v682 = vunpack.c.l.b16 %v614
    %v683 = vunpack.c.l.b16 %v615
    %v684 = vunpack.c.l.b16 %v616
    %v685 = vunpack.c.l.b16 %v617
    %v686 = vpack.c.b16 %v655, %v654
    %v687 = vpack.c.b16 %v657, %v656
    %v688 = vpack.c.b16 %v659, %v658
    %v689 = vpack.c.b16 %v661, %v660
    %v690 = vpack.c.b16 %v663, %v662
    %v691 = vpack.c.b16 %v665, %v664
    %v692 = vpack.c.b16 %v667, %v666
    %v693 = vpack.c.b16 %v669, %v668
    %v694 = vpack.c.b16 %v671, %v670
    %v695 = vpack.c.b16 %v673, %v672
    %v696 = vpack.c.b16 %v675, %v674
    %v697 = vpack.c.b16 %v677, %v676
    %v698 = vpack.c.b16 %v679, %v678
    %v699 = vpack.c.b16 %v681, %v680
    %v700 = vpack.c.b16 %v683, %v682
    %v701 = vpack.c.b16 %v685, %v684
    %718 = vmatpush.bf16.msra.mxu0 %v693
    %719 = vmatpush.bf16.msra.mxu0 %v692
    %720 = vmatpush.bf16.msra.mxu0 %v691
    %721 = vmatpush.bf16.msra.mxu0 %v690
    %722 = vmatpush.bf16.msra.mxu0 %v689
    %723 = vmatpush.bf16.msra.mxu0 %v688
    %724 = vmatpush.bf16.msra.mxu0 %v687
    %725 = vmatpush.bf16.msra.mxu0 %v686
    %726 = vmatmul.bf16.gmra.mxu0 %v584
    %v727 = vpop.f32.mrf.mxu0
    %v728 = vadd.f32 %v620, %v727
    %v729 = vpop.f32.mrf.mxu0
    %730 = vdwg.mxu0
    %731 = vmatpush.bf16.msra.mxu0 %v701
    %732 = vmatpush.bf16.msra.mxu0 %v700
    %733 = vmatpush.bf16.msra.mxu0 %v699
    %734 = vmatpush.bf16.msra.mxu0 %v698
    %735 = vmatpush.bf16.msra.mxu0 %v697
    %736 = vmatpush.bf16.msra.mxu0 %v696
    %737 = vmatpush.bf16.msra.mxu0 %v695
    %738 = vmatpush.bf16.msra.mxu0 %v694
    %739 = vmatmul.bf16.gmra.mxu0 %v585
    %v740 = vpop.f32.mrf.mxu0
    %v741 = vadd.f32 %v728, %v740
    %v742 = vpop.f32.mrf.mxu0
    %743 = vdwg.mxu0
    %v744 = vmax.f32 %v741, 0.0
    %v745 = vpack.c.bf16 %v744, %v744
    %v746 = vld [vmem:[#allocation9] sm:$0xf]
    %v747 = vld [vmem:[#allocation9 + $0x4] sm:$0xf]
    %v748 = vld [vmem:[#allocation9 + $0x8] sm:$0xf]
    %v749 = vld [vmem:[#allocation9 + $0xc] sm:$0xf]
    %v750 = vld [vmem:[#allocation9 + $0x10] sm:$0xf]
    %v751 = vld [vmem:[#allocation9 + $0x14] sm:$0xf]
    %v752 = vld [vmem:[#allocation9 + $0x18] sm:$0xf]
    %v753 = vld [vmem:[#allocation9 + $0x1c] sm:$0xf]
    %v754 = vld [vmem:[#allocation9 + $0x20] sm:$0xf]
    %v755 = vld [vmem:[#allocation9 + $0x24] sm:$0xf]
    %v756 = vld [vmem:[#allocation9 + $0x28] sm:$0xf]
    %v757 = vld [vmem:[#allocation9 + $0x2c] sm:$0xf]
    %v758 = vld [vmem:[#allocation9 + $0x30] sm:$0xf]
    %v759 = vld [vmem:[#allocation9 + $0x34] sm:$0xf]
    %v760 = vld [vmem:[#allocation9 + $0x38] sm:$0xf]
    %v761 = vld [vmem:[#allocation9 + $0x3c] sm:$0xf]
    %v762 = vld [vmem:[%s10] sm:$0x1]
    %v764 = vperm.slane %v762, 0
    %v782 = vunpack.c.l.b16 %v746
    %v783 = vunpack.c.l.b16 %v747
    %v784 = vunpack.c.l.b16 %v748
    %v785 = vunpack.c.l.b16 %v749
    %v786 = vunpack.c.l.b16 %v750
    %v787 = vunpack.c.l.b16 %v751
    %v788 = vunpack.c.l.b16 %v752
    %v789 = vunpack.c.l.b16 %v753
    %v790 = vunpack.c.l.b16 %v754
    %v791 = vunpack.c.l.b16 %v755
    %v792 = vunpack.c.l.b16 %v756
    %v793 = vunpack.c.l.b16 %v757
    %v794 = vunpack.c.l.b16 %v758
    %v795 = vunpack.c.l.b16 %v759
    %v796 = vunpack.c.l.b16 %v760
    %v797 = vunpack.c.l.b16 %v761
    %v798 = vpack.c.b16 %v783, %v782
    %v799 = vpack.c.b16 %v785, %v784
    %v800 = vpack.c.b16 %v787, %v786
    %v801 = vpack.c.b16 %v789, %v788
    %v802 = vpack.c.b16 %v791, %v790
    %v803 = vpack.c.b16 %v793, %v792
    %v804 = vpack.c.b16 %v795, %v794
    %v805 = vpack.c.b16 %v797, %v796
    %814 = vmatpush.bf16.msra.mxu0 %v805
    %815 = vmatpush.bf16.msra.mxu0 %v804
    %816 = vmatpush.bf16.msra.mxu0 %v803
    %817 = vmatpush.bf16.msra.mxu0 %v802
    %818 = vmatpush.bf16.msra.mxu0 %v801
    %819 = vmatpush.bf16.msra.mxu0 %v800
    %820 = vmatpush.bf16.msra.mxu0 %v799
    %821 = vmatpush.bf16.msra.mxu0 %v798
    %822 = vmatmul.bf16.gmra.mxu0 %v745
    %v823 = vpop.f32.mrf.mxu0
    %v824 = vadd.f32 %v764, %v823
    %v825 = vpop.f32.mrf.mxu0
    %826 = vdwg.mxu0
    %827 = vst [vmem:[%s11] sm:$0xff] %v824
    // Predicated region
    $region66: #{dqn_forward.1} parent=1 // pred_check
      _
    $region67: #{dqn_forward.1} parent=1 // pred_check_branch
      %829 = sbr.rel (0) target = $region69
    $region68: #{dqn_forward.1} parent=1 // pred_region
      _
    $region69: #{dqn_forward.1} parent=1 // pred_fallthru
      _
    // Predicated region
    $region70: #{dqn_forward.1} parent=1 // pred_check
      _
    $region71: #{dqn_forward.1} parent=1 // pred_check_branch
      %831 = sbr.rel (0) target = $region73
    $region72: #{dqn_forward.1} parent=1 // pred_region
      _
    $region73: #{dqn_forward.1} parent=1 // pred_fallthru
      _
    %832 = vsyncpa [#allocation3], 1
    %833 = vsyncpa [#allocation5], 1
    %834 = vsyncpa [#allocation8], 1

</llo_original>
